<compile_context>
chip_gen: v7x
topology: tpu7x:2x2x1
jax: 0.10.0
libtpu: 0.0.40
codegen_flags: <defaults>
</compile_context>

<pallas_src>
import jax
import jax.numpy as jnp
from jax.experimental import pallas as pl
from jax.experimental.pallas import tpu as pltpu

D_MODEL = 9
HEAD_SIZE = 3
X_PAD = 16          # homogeneous input width: d_model lanes + bias lane, padded to 16
V_PAD = 128         # lane-dense V / output width (unmasked stores)


def attention_head_kernel(x_ref, m_ref, wv_ref, o_ref):
    x = x_ref[0]                                                    # (S, X_PAD)

    # att = (x Wq^T + bq)(x Wk^T + bk)^T / sqrt(hs) == x_h @ M @ x_h^T,
    # with M precomputed at pack time (bias via the homogeneous lane).
    xm = jnp.dot(x, m_ref[...], preferred_element_type=jnp.float32)        # (S, X_PAD)
    att = jax.lax.dot_general(xm, x, (((1,), (1,)), ((), ())),
                              preferred_element_type=jnp.float32)          # (S, S)

    # Numerically-stable softmax; reciprocal goes to the EUP slot.
    att = att - jnp.max(att, axis=-1, keepdims=True)
    e = jnp.exp(att)
    p = e * pl.reciprocal(jnp.sum(e, axis=-1, keepdims=True), approx=True)

    # V projection (bias folded via homogeneous lane) and weighted sum.
    v = jnp.dot(x, wv_ref[...], preferred_element_type=jnp.float32)        # (S, V_PAD)
    o_ref[0] = jnp.dot(p, v, preferred_element_type=jnp.float32)           # (S, V_PAD)


def init_params(key):
    """Deterministic synthetic params in PyTorch nn.Linear layout."""
    ks = jax.random.split(key, 6)
    bound = 1.0 / (D_MODEL ** 0.5)

    def u(k, shape):
        return jax.random.uniform(k, shape, jnp.float32, -bound, bound)

    return {
        "wq": u(ks[0], (HEAD_SIZE, D_MODEL)), "bq": u(ks[1], (HEAD_SIZE,)),
        "wk": u(ks[2], (HEAD_SIZE, D_MODEL)), "bk": u(ks[3], (HEAD_SIZE,)),
        "wv": u(ks[4], (HEAD_SIZE, D_MODEL)), "bv": u(ks[5], (HEAD_SIZE,)),
    }


def pack_params(p):
    """Fold Q/K weights+biases+scale into M (16,16); pad V weights to (16,128)."""
    scale = 1.0 / (HEAD_SIZE ** 0.5)

    def homog(w, b):
        wh = jnp.zeros((X_PAD, HEAD_SIZE), jnp.float32)
        return wh.at[:D_MODEL].set(w.T).at[D_MODEL].set(b)

    wq_h = homog(p["wq"], p["bq"])
    wk_h = homog(p["wk"], p["bk"])
    wv_h = homog(p["wv"], p["bv"])

    m_packed = (wq_h @ wk_h.T) * scale                                  # (X_PAD, X_PAD)
    wv_packed = jnp.zeros((X_PAD, V_PAD), jnp.float32).at[:, :HEAD_SIZE].set(wv_h)
    return m_packed, wv_packed


@jax.jit
def attention_head(x, m_packed, wv_packed):
    B, S, _ = x.shape
    # Homogeneous, lightly padded input: lanes [0,9)=x, lane 9 = 1.0 (bias),
    # lanes [10,16) = 0.  Layout plumbing only.
    x_h = jnp.concatenate(
        [x, jnp.ones((B, S, 1), x.dtype),
         jnp.zeros((B, S, X_PAD - D_MODEL - 1), x.dtype)], axis=-1)

    flops = B * (2 * S * X_PAD * X_PAD          # x_h @ M
                 + 2 * S * S * X_PAD            # (x_h M) @ x_h^T
                 + 2 * S * X_PAD * V_PAD        # x_h @ Wv_h
                 + 2 * S * S * V_PAD)           # p @ v
    bytes_accessed = 4 * (B * S * X_PAD + B * S * V_PAD
                          + X_PAD * X_PAD + X_PAD * V_PAD)

    out = pl.pallas_call(
        attention_head_kernel,
        out_shape=jax.ShapeDtypeStruct((B, S, V_PAD), jnp.float32),
        grid=(B,),
        in_specs=[
            pl.BlockSpec((1, S, X_PAD), lambda b: (b, 0, 0)),
            pl.BlockSpec((X_PAD, X_PAD), lambda b: (0, 0)),   # constant block: fetched once
            pl.BlockSpec((X_PAD, V_PAD), lambda b: (0, 0)),   # constant block: fetched once
        ],
        out_specs=pl.BlockSpec((1, S, V_PAD), lambda b: (b, 0, 0)),
        compiler_params=pltpu.CompilerParams(
            dimension_semantics=("parallel",)),
        cost_estimate=pl.CostEstimate(flops=flops,
                                      transcendentals=B * S * (S + 1),
                                      bytes_accessed=bytes_accessed),
    )(x_h, m_packed, wv_packed)
    return out[..., :HEAD_SIZE]


def reference(x, p):
    """Pure-JAX re-implementation of the PyTorch AttentionHead.forward."""
    q = x @ p["wq"].T + p["bq"]
    k = x @ p["wk"].T + p["bk"]
    v = x @ p["wv"].T + p["bv"]
    att = (q @ jnp.swapaxes(k, -1, -2)) / (HEAD_SIZE ** 0.5)
    att = jax.nn.softmax(att, axis=-1)
    return att @ v


if __name__ == "__main__":
    key = jax.random.PRNGKey(0)
    kp, kx = jax.random.split(key)
    params = init_params(kp)
    m_packed, wv_packed = pack_params(params)

    B, S = 2, 8
    x = jax.random.normal(kx, (B, S, D_MODEL), jnp.float32)

    out = jax.block_until_ready(attention_head(x, m_packed, wv_packed))

    ref = reference(x, params)
    assert out.shape == (B, S, HEAD_SIZE)
    # Tolerance covers the approx (EUP vrcp) softmax reciprocal and the
    # (exact-in-real-arithmetic) Q.K weight folding.
    assert jnp.allclose(out, ref, atol=2e-3, rtol=2e-3), (
        f"max abs err {jnp.max(jnp.abs(out - ref))}")

    print("KERNEL_OK")
</pallas_src>

<mosaic_0001>
module attributes {stable_mosaic.version = 11 : i64} {
  func.func @attention_head_kernel(%arg0: i32, %arg1: memref<1x8x16xf32, #tpu.memory_space<vmem>>, %arg2: memref<16x16xf32, #tpu.memory_space<vmem>>, %arg3: memref<16x128xf32, #tpu.memory_space<vmem>>, %arg4: memref<1x8x128xf32, #tpu.memory_space<vmem>>) attributes {dimension_semantics = [#tpu.dimension_semantics<parallel>], iteration_bounds = array<i64: 2>, scalar_prefetch = 0 : i64, scratch_operands = 0 : i64, tpu.core_type = #tpu.core_type<tc>, window_params = [{transform_indices = @transform_0, window_bounds = array<i64: 1, 8, 16>}, {pipeline_mode = #tpu.pipeline_mode<synchronous>, transform_indices = @transform_1, window_bounds = array<i64: 16, 16>}, {pipeline_mode = #tpu.pipeline_mode<synchronous>, transform_indices = @transform_2, window_bounds = array<i64: 16, 128>}, {transform_indices = @transform_3, window_bounds = array<i64: 1, 8, 128>}]} {
    %c0 = arith.constant 0 : index
    %c0_0 = arith.constant 0 : index
    %c0_1 = arith.constant 0 : index
    %0 = vector.load %arg1[%c0, %c0_0, %c0_1] : memref<1x8x16xf32, #tpu.memory_space<vmem>>, vector<1x8x16xf32>
    %1 = vector.shape_cast %0 : vector<1x8x16xf32> to vector<8x16xf32>
    %c0_2 = arith.constant 0 : index
    %c0_3 = arith.constant 0 : index
    %2 = vector.load %arg2[%c0_2, %c0_3] : memref<16x16xf32, #tpu.memory_space<vmem>>, vector<16x16xf32>
    %cst = arith.constant dense<0.000000e+00> : vector<8x16xf32>
    %3 = tpu.matmul %1, %2, %cst {dimension_numbers = #tpu.dot_dimension_numbers<[1], [0], [0], [1], [0, 0, 1, 1], [], []>} : vector<8x16xf32>, vector<16x16xf32>, vector<8x16xf32> -> vector<8x16xf32>
    %cst_4 = arith.constant dense<0.000000e+00> : vector<8x8xf32>
    %4 = tpu.matmul %3, %1, %cst_4 {dimension_numbers = #tpu.dot_dimension_numbers<[1], [1], [0], [0], [0, 0, 1, 0], [], []>} : vector<8x16xf32>, vector<8x16xf32>, vector<8x8xf32> -> vector<8x8xf32>
    %cst_5 = arith.constant dense<0xFF800000> : vector<8xf32>
    %5 = vector.multi_reduction <maximumf>, %4, %cst_5 [1] : vector<8x8xf32> to vector<8xf32>
    %6 = vector.shape_cast %5 : vector<8xf32> to vector<8x1xf32>
    %7 = vector.broadcast %6 : vector<8x1xf32> to vector<8x8xf32>
    %8 = arith.subf %4, %7 : vector<8x8xf32>
    %9 = math.exp %8 : vector<8x8xf32>
    %cst_6 = arith.constant dense<0.000000e+00> : vector<8xf32>
    %10 = vector.multi_reduction <add>, %9, %cst_6 [1] : vector<8x8xf32> to vector<8xf32>
    %11 = vector.shape_cast %10 : vector<8xf32> to vector<8x1xf32>
    %12 = tpu.reciprocal %11 {approx = true} : vector<8x1xf32> -> vector<8x1xf32>
    %13 = vector.broadcast %12 : vector<8x1xf32> to vector<8x8xf32>
    %14 = arith.mulf %9, %13 : vector<8x8xf32>
    %c0_7 = arith.constant 0 : index
    %c0_8 = arith.constant 0 : index
    %15 = vector.load %arg3[%c0_7, %c0_8] : memref<16x128xf32, #tpu.memory_space<vmem>>, vector<16x128xf32>
    %cst_9 = arith.constant dense<0.000000e+00> : vector<8x128xf32>
    %16 = tpu.matmul %1, %15, %cst_9 {dimension_numbers = #tpu.dot_dimension_numbers<[1], [0], [0], [1], [0, 0, 1, 1], [], []>} : vector<8x16xf32>, vector<16x128xf32>, vector<8x128xf32> -> vector<8x128xf32>
    %cst_10 = arith.constant dense<0.000000e+00> : vector<8x128xf32>
    %17 = tpu.matmul %14, %16, %cst_10 {dimension_numbers = #tpu.dot_dimension_numbers<[1], [0], [0], [1], [0, 0, 1, 1], [], []>} : vector<8x8xf32>, vector<8x128xf32>, vector<8x128xf32> -> vector<8x128xf32>
    %c0_11 = arith.constant 0 : index
    %c0_12 = arith.constant 0 : index
    %c0_13 = arith.constant 0 : index
    %18 = vector.load %arg4[%c0_11, %c0_12, %c0_13] : memref<1x8x128xf32, #tpu.memory_space<vmem>>, vector<1x8x128xf32>
    %19 = vector.shape_cast %18 : vector<1x8x128xf32> to vector<8x128xf32>
    %20 = vector.shape_cast %17 : vector<8x128xf32> to vector<1x8x128xf32>
    tpu.vector_store %arg4[%c0_11, %c0_12, %c0_13], %20 {strides = array<i32>} : memref<1x8x128xf32, #tpu.memory_space<vmem>>, vector<1x8x128xf32>,
    return
  }
  func.func @transform_0(%arg0: i32) -> (i32, i32, i32) {
    %c0_i32 = arith.constant 0 : i32
    %c0_i32_0 = arith.constant 0 : i32
    %c0_i32_1 = arith.constant 0 : i32
    return %arg0, %c0_i32, %c0_i32_0 : i32, i32, i32
  }
  func.func @transform_1(%arg0: i32) -> (i32, i32) {
    %c0_i32 = arith.constant 0 : i32
    %c0_i32_0 = arith.constant 0 : i32
    %c0_i32_1 = arith.constant 0 : i32
    return %c0_i32, %c0_i32_0 : i32, i32
  }
  func.func @transform_2(%arg0: i32) -> (i32, i32) {
    %c0_i32 = arith.constant 0 : i32
    %c0_i32_0 = arith.constant 0 : i32
    %c0_i32_1 = arith.constant 0 : i32
    return %c0_i32, %c0_i32_0 : i32, i32
  }
  func.func @transform_3(%arg0: i32) -> (i32, i32, i32) {
    %c0_i32 = arith.constant 0 : i32
    %c0_i32_0 = arith.constant 0 : i32
    %c0_i32_1 = arith.constant 0 : i32
    return %arg0, %c0_i32, %c0_i32_0 : i32, i32, i32
  }
}

</mosaic_0001>

<llo_original>
// kernel: attention_head.1
$region0: #{attention_head.1}
  #allocation0 [shape = 'u32[]', space=smem, size = 0x4, offset = 0x4, fixed_abs, tag = 'smem constant byte address 0x4 - core index']
  #allocation1 [shape = 'u32[144,128]{1,0:T(1,128)}', space=vmem, size = 0x12000, scoped, tag = 'internal scratch']
  %s0 = inlined_call_operand.vmem [shape: f32[2,8,16], index: 0, kind: input, shape index: {}]
  %s1 = inlined_call_operand.vmem [shape: f32[16,16], index: 1, kind: input, shape index: {}]
  %s2 = inlined_call_operand.vmem [shape: f32[16,128], index: 2, kind: input, shape index: {}]
  %s3 = inlined_call_operand.vmem [shape: f32[2,8,128], index: 3, kind: output, shape index: {}]
  %s4 = sld [smem:[#allocation0]]
  $region45: #{attention_head.1} parent=0
    _
  %s6 = ssub.s32 1, %s4
  %s7 = scalar_select 0, %s6, %s4
  loop: start=0, step=1, limit=4
  $region2: #{attention_head.1} parent=0 // loop_pre_header
    _
  $region3: #{attention_head.1} parent=0 // loop_header
    %s9 = sphi 0, %s13
    %p10 = scmp.ge.s32.totalorder %s9, 4
    %s19 = sphi 0, %s21
    %s22 = sphi 0, %s19
    %s23 = sphi 0, %s22
    %s39 = sphi 0, %s23
    %s43 = sphi 0, %s43
    %s45 = sphi 0, %s43
    %s46 = sphi 0, %s45
    %s60 = sphi 0, %s46
    %s64 = sphi 0, %s64
    %s66 = sphi 0, %s64
    %s67 = sphi 0, %s66
    %s81 = sphi 0, %s67
    %s87 = sphi 0, %s89
    %s90 = sphi 0, %s87
    %s91 = sphi 0, %s90
    %s107 = sphi 0, %s91
  $region4: #{attention_head.1} parent=0 // loop_header_branch
    %12 = sbr.rel (%p10) target = $region8
  $region5: #{attention_head.1} parent=0 // loop_body
    %s14 = ssub.s32 %s9, 1
    %s15 = ssub.s32 %s9, 2
    %s16 = sadd.s32 %s9, 1
    %s17 = ssub.s32 %s9, %s16
    %p18 = scmp.eq.s32.totalorder %s17, 0
    %s20 = sadd.s32 %s19, 1
    %s21 = scalar_select %p18, %s19, %s20
    %p24 = pneg %p18
    %p25 = scmp.eq.s32.totalorder %s9, 1
    %p26 = por %p24, %p25
    %p27 = scmp.ne.s32.totalorder %s19, %s22
    %p28 = scmp.eq.s32.totalorder %s9, 0
    %p29 = por %p27, %p28
    %p30 = scmp.ne.s32.totalorder %s19, %s22
    %p31 = scmp.eq.s32.totalorder %s14, 1
    %p32 = por %p30, %p31
    %p33 = scmp.ne.s32.totalorder %s22, %s23
    %p34 = scmp.eq.s32.totalorder %s14, 0
    %p35 = por %p33, %p34
    %p36 = scmp.ne.s32.totalorder %s22, %s23
    %p37 = scmp.eq.s32.totalorder %s15, 1
    %p38 = por %p36, %p37
    %p40 = scmp.ne.s32.totalorder %s23, %s39
    %p41 = scmp.eq.s32.totalorder %s15, 0
    %p42 = por %p40, %p41
    %s44 = sadd.s32 %s43, 1
    %p47 = scmp.eq.s32.totalorder %s9, 1
    %p48 = scmp.ne.s32.totalorder %s43, %s45
    %p49 = scmp.eq.s32.totalorder %s9, 0
    %p50 = por %p48, %p49
    %p51 = scmp.ne.s32.totalorder %s43, %s45
    %p52 = scmp.eq.s32.totalorder %s14, 1
    %p53 = por %p51, %p52
    %p54 = scmp.ne.s32.totalorder %s45, %s46
    %p55 = scmp.eq.s32.totalorder %s14, 0
    %p56 = por %p54, %p55
    %p57 = scmp.ne.s32.totalorder %s45, %s46
    %p58 = scmp.eq.s32.totalorder %s15, 1
    %p59 = por %p57, %p58
    %p61 = scmp.ne.s32.totalorder %s46, %s60
    %p62 = scmp.eq.s32.totalorder %s15, 0
    %p63 = por %p61, %p62
    %s65 = sadd.s32 %s64, 1
    %p68 = scmp.eq.s32.totalorder %s9, 1
    %p69 = scmp.ne.s32.totalorder %s64, %s66
    %p70 = scmp.eq.s32.totalorder %s9, 0
    %p71 = por %p69, %p70
    %p72 = scmp.ne.s32.totalorder %s64, %s66
    %p73 = scmp.eq.s32.totalorder %s14, 1
    %p74 = por %p72, %p73
    %p75 = scmp.ne.s32.totalorder %s66, %s67
    %p76 = scmp.eq.s32.totalorder %s14, 0
    %p77 = por %p75, %p76
    %p78 = scmp.ne.s32.totalorder %s66, %s67
    %p79 = scmp.eq.s32.totalorder %s15, 1
    %p80 = por %p78, %p79
    %p82 = scmp.ne.s32.totalorder %s67, %s81
    %p83 = scmp.eq.s32.totalorder %s15, 0
    %p84 = por %p82, %p83
    %s85 = ssub.s32 %s9, %s16
    %p86 = scmp.eq.s32.totalorder %s85, 0
    %s88 = sadd.s32 %s87, 1
    %s89 = scalar_select %p86, %s87, %s88
    %p92 = pneg %p86
    %p93 = scmp.eq.s32.totalorder %s9, 1
    %p94 = por %p92, %p93
    %p95 = scmp.ne.s32.totalorder %s87, %s90
    %p96 = scmp.eq.s32.totalorder %s9, 0
    %p97 = por %p95, %p96
    %p98 = scmp.ne.s32.totalorder %s87, %s90
    %p99 = scmp.eq.s32.totalorder %s14, 1
    %p100 = por %p98, %p99
    %p101 = scmp.ne.s32.totalorder %s90, %s91
    %p102 = scmp.eq.s32.totalorder %s14, 0
    %p103 = por %p101, %p102
    %p104 = scmp.ne.s32.totalorder %s90, %s91
    %p105 = scmp.eq.s32.totalorder %s15, 1
    %p106 = por %p104, %p105
    %p108 = scmp.ne.s32.totalorder %s91, %s107
    %p109 = scmp.eq.s32.totalorder %s15, 0
    %p110 = por %p108, %p109
    %p111 = scmp.le.s32.totalorder 1, %s9
    %p112 = scmp.lt.s32.totalorder %s9, 3
    %p113 = pnand %p111, %p112
    %p114 = pneg %p113
    // Predicated region
    $region9: #{attention_head.1} parent=5 // pred_check
      _
    $region10: #{attention_head.1} parent=5 // pred_check_branch
      %116 = sbr.rel (%p113) target = $region12
    $region11: #{attention_head.1} parent=5 // pred_region
      %s117 = ssub.s32 %s9, 1
      // Predicated region
      $region13: #{attention_head.1} parent=11 // pred_check
        %p118 = pneg %p56
      $region14: #{attention_head.1} parent=11 // pred_check_branch
        %120 = sbr.rel (%p118) target = $region16
      $region15: #{attention_head.1} parent=11 // pred_region
        _
      $region16: #{attention_head.1} parent=11 // pred_fallthru
        _
      // Predicated region
      $region17: #{attention_head.1} parent=11 // pred_check
        %p121 = pneg %p77
      $region18: #{attention_head.1} parent=11 // pred_check_branch
        %123 = sbr.rel (%p121) target = $region20
      $region19: #{attention_head.1} parent=11 // pred_region
        _
      $region20: #{attention_head.1} parent=11 // pred_fallthru
        _
    $region12: #{attention_head.1} parent=5 // pred_fallthru
      _
    %p124 = scmp.lt.s32.totalorder %s9, 2
    // Predicated region
    $region21: #{attention_head.1} parent=5 // pred_check
      %p125 = pneg %p124
    $region22: #{attention_head.1} parent=5 // pred_check_branch
      %127 = sbr.rel (%p125) target = $region24
    $region23: #{attention_head.1} parent=5 // pred_region
      // Predicated region
      $region25: #{attention_head.1} parent=23 // pred_check
        %p128 = pneg %p29
      $region26: #{attention_head.1} parent=23 // pred_check_branch
        %130 = sbr.rel (%p128) target = $region28
      $region27: #{attention_head.1} parent=23 // pred_region
        %p131 = scmp.lt.s32.totalorder %s9, 1
        %s132 = scalar_select %p131, %s9, 1
        %s133 = smul.addr %s132, 8
        %s134 = scalar_lea.vmem %s0, %s133
      $region28: #{attention_head.1} parent=23 // pred_fallthru
        _
    $region24: #{attention_head.1} parent=5 // pred_fallthru
      _
    %p135 = scmp.le.s32.totalorder 1, %s9
    %p136 = scmp.lt.s32.totalorder %s9, 3
    %p137 = pnand %p135, %p136
    %p138 = pneg %p137
    // Predicated region
    $region29: #{attention_head.1} parent=5 // pred_check
      _
    $region30: #{attention_head.1} parent=5 // pred_check_branch
      %140 = sbr.rel (%p137) target = $region32
    $region31: #{attention_head.1} parent=5 // pred_region
      %s141 = ssub.s32 %s9, 1
      %p142 = scmp.lt.s32.totalorder %s14, 1
      %s143 = scalar_select %p142, %s14, 1
      %s144 = smul.addr %s143, 8
      %s145 = scalar_lea.vmem %s0, %s144
      %p146 = pneg %p35
      %p147 = pneg %p32
      %p148 = pneg %p56
      %p149 = pneg %p53
      %p150 = pneg %p77
      %p151 = pneg %p74
      %p152 = pneg %p103
      %p153 = pneg %p100
      %p154 = scmp.lt.s32.totalorder %s14, 1
      %s155 = scalar_select %p154, %s14, 1
      %s156 = smul.addr %s155, 8
      %s157 = scalar_lea.vmem %s3, %s156
      %p158 = scmp.lt.s32.totalorder %s14, 1
      %s159 = scalar_select %p158, %s14, 1
      %s160 = smul.addr %s159, 8
      %s161 = scalar_lea.vmem %s0, %s160
      %p162 = scmp.lt.s32.totalorder %s14, 1
      %s163 = scalar_select %p162, %s14, 1
      %s164 = smul.addr %s163, 8
      %s165 = scalar_lea.vmem %s3, %s164
      %v166 = vld [vmem:[%s161] sm:$0xff]
      %v167 = vld [vmem:[%s1] sm:$0xff]
      %v168 = vld [vmem:[%s1 + $0x8] sm:$0xff]
      %vm169 = vcmask 130048
      %v171 = vsel %vm169, %v166, 0
      %173 = vmatprep.subr.mxu0 0.0
      %174 = vmatpush1.msra.mxu0 %v167
      %175 = vmatprep.subr.mxu0 0.0
      %176 = vmatpush1.msra.mxu0 %v168
      %177 = vmatprep.subr.mxu0 0.0
      %178 = vmatpush1.msra.mxu0 0.0
      %179 = vmatprep.subr.mxu0 0.0
      %180 = vmatpush1.msra.mxu0 0.0
      %181 = vmatprep.subr.mxu0 0.0
      %182 = vmatpush1.msra.mxu0 0.0
      %183 = vmatprep.subr.mxu0 0.0
      %184 = vmatpush1.msra.mxu0 0.0
      %185 = vmatprep.subr.mxu0 0.0
      %186 = vmatpush1.msra.mxu0 0.0
      %187 = vmatprep.subr.mxu0 0.0
      %188 = vmatpush1.msra.mxu0 0.0
      %189 = vmatprep.subr.mxu0 0.0
      %190 = vmatpush1.msra.mxu0 0.0
      %191 = vmatprep.subr.mxu0 0.0
      %192 = vmatpush1.msra.mxu0 0.0
      %193 = vmatprep.subr.mxu0 0.0
      %194 = vmatpush1.msra.mxu0 0.0
      %195 = vmatprep.subr.mxu0 0.0
      %196 = vmatpush1.msra.mxu0 0.0
      %197 = vmatprep.subr.mxu0 0.0
      %198 = vmatpush1.msra.mxu0 0.0
      %199 = vmatprep.subr.mxu0 0.0
      %200 = vmatpush1.msra.mxu0 0.0
      %201 = vmatprep.subr.mxu0 0.0
      %202 = vmatpush1.msra.mxu0 0.0
      %203 = vmatprep.subr.mxu0 0.0
      %204 = vmatpush1.msra.mxu0 0.0
      %205 = vmatprep.subr.mxu0 0.0
      %206 = vmatpush1.msra.mxu0 0.0
      %207 = vmatprep.subr.mxu0 0.0
      %208 = vmatpush1.msra.mxu0 0.0
      %209 = vmatprep.subr.mxu0 0.0
      %210 = vmatpush1.msra.mxu0 0.0
      %211 = vmatprep.subr.mxu0 0.0
      %212 = vmatpush1.msra.mxu0 0.0
      %213 = vmatprep.subr.mxu0 0.0
      %214 = vmatpush1.msra.mxu0 0.0
      %215 = vmatprep.subr.mxu0 0.0
      %216 = vmatpush1.msra.mxu0 0.0
      %217 = vmatprep.subr.mxu0 0.0
      %218 = vmatpush1.msra.mxu0 0.0
      %219 = vmatprep.subr.mxu0 0.0
      %220 = vmatpush1.msra.mxu0 0.0
      %221 = vmatprep.subr.mxu0 0.0
      %222 = vmatpush1.msra.mxu0 0.0
      %223 = vmatprep.subr.mxu0 0.0
      %224 = vmatpush1.msra.mxu0 0.0
      %225 = vmatprep.subr.mxu0 0.0
      %226 = vmatpush1.msra.mxu0 0.0
      %227 = vmatprep.subr.mxu0 0.0
      %228 = vmatpush1.msra.mxu0 0.0
      %229 = vmatprep.subr.mxu0 0.0
      %230 = vmatpush1.msra.mxu0 0.0
      %231 = vmatprep.subr.mxu0 0.0
      %232 = vmatpush1.msra.mxu0 0.0
      %233 = vmatprep.subr.mxu0 0.0
      %234 = vmatpush1.msra.mxu0 0.0
      %235 = vmatprep.subr.mxu0 0.0
      %236 = vmatpush1.msra.mxu0 0.0
      %237 = vmatprep.mubr.f32.mxu0 0.0
      %238 = vmatmul.mubr.f32.gmra.mrb[0].mxu0 %v171
      %v239 = vpop.f32.mrb[0].mxu0
      %v240 = vadd.f32 0.0, %v239
      %v241 = vpop.f32.mrb[0].mxu0
      %242 = vdwg.mxu0
      %v244 = vsel %vm169, %v240, 0
      %246 = vmatprep.subr.mxu0 0.0
      %247 = vmatpush1.xpose.msra.mxu0 %v171
      %248 = vmatprep.subr.mxu0 0.0
      %249 = vmatpush1.xpose.msra.mxu0 0.0
      %250 = vmatprep.subr.mxu0 0.0
      %251 = vmatpush1.xpose.msra.mxu0 0.0
      %252 = vmatprep.subr.mxu0 0.0
      %253 = vmatpush1.xpose.msra.mxu0 0.0
      %254 = vmatprep.subr.mxu0 0.0
      %255 = vmatpush1.xpose.msra.mxu0 0.0
      %256 = vmatprep.subr.mxu0 0.0
      %257 = vmatpush1.xpose.msra.mxu0 0.0
      %258 = vmatprep.subr.mxu0 0.0
      %259 = vmatpush1.xpose.msra.mxu0 0.0
      %260 = vmatprep.subr.mxu0 0.0
      %261 = vmatpush1.xpose.msra.mxu0 0.0
      %262 = vmatprep.subr.mxu0 0.0
      %263 = vmatpush1.xpose.msra.mxu0 0.0
      %264 = vmatprep.subr.mxu0 0.0
      %265 = vmatpush1.xpose.msra.mxu0 0.0
      %266 = vmatprep.subr.mxu0 0.0
      %267 = vmatpush1.xpose.msra.mxu0 0.0
      %268 = vmatprep.subr.mxu0 0.0
      %269 = vmatpush1.xpose.msra.mxu0 0.0
      %270 = vmatprep.subr.mxu0 0.0
      %271 = vmatpush1.xpose.msra.mxu0 0.0
      %272 = vmatprep.subr.mxu0 0.0
      %273 = vmatpush1.xpose.msra.mxu0 0.0
      %274 = vmatprep.subr.mxu0 0.0
      %275 = vmatpush1.xpose.msra.mxu0 0.0
      %276 = vmatprep.subr.mxu0 0.0
      %277 = vmatpush1.xpose.msra.mxu0 0.0
      %278 = vmatprep.subr.mxu0 0.0
      %279 = vmatpush1.xpose.msra.mxu0 0.0
      %280 = vmatprep.subr.mxu0 0.0
      %281 = vmatpush1.xpose.msra.mxu0 0.0
      %282 = vmatprep.subr.mxu0 0.0
      %283 = vmatpush1.xpose.msra.mxu0 0.0
      %284 = vmatprep.subr.mxu0 0.0
      %285 = vmatpush1.xpose.msra.mxu0 0.0
      %286 = vmatprep.subr.mxu0 0.0
      %287 = vmatpush1.xpose.msra.mxu0 0.0
      %288 = vmatprep.subr.mxu0 0.0
      %289 = vmatpush1.xpose.msra.mxu0 0.0
      %290 = vmatprep.subr.mxu0 0.0
      %291 = vmatpush1.xpose.msra.mxu0 0.0
      %292 = vmatprep.subr.mxu0 0.0
      %293 = vmatpush1.xpose.msra.mxu0 0.0
      %294 = vmatprep.subr.mxu0 0.0
      %295 = vmatpush1.xpose.msra.mxu0 0.0
      %296 = vmatprep.subr.mxu0 0.0
      %297 = vmatpush1.xpose.msra.mxu0 0.0
      %298 = vmatprep.subr.mxu0 0.0
      %299 = vmatpush1.xpose.msra.mxu0 0.0
      %300 = vmatprep.subr.mxu0 0.0
      %301 = vmatpush1.xpose.msra.mxu0 0.0
      %302 = vmatprep.subr.mxu0 0.0
      %303 = vmatpush1.xpose.msra.mxu0 0.0
      %304 = vmatprep.subr.mxu0 0.0
      %305 = vmatpush1.xpose.msra.mxu0 0.0
      %306 = vmatprep.subr.mxu0 0.0
      %307 = vmatpush1.xpose.msra.mxu0 0.0
      %308 = vmatprep.subr.mxu0 0.0
      %309 = vmatpush1.xpose.msra.mxu0 0.0
      %310 = vmatprep.mubr.f32.mxu0 0.0
      %311 = vmatmul.mubr.f32.gmra.mrb[0].mxu0 %v244
      %v312 = vpop.f32.mrb[0].mxu0
      %v313 = vadd.f32 0.0, %v312
      %v314 = vpop.f32.mrb[0].mxu0
      %315 = vdwg.mxu0
      %vm316 = vcmask 64512
      %v317 = vsel %vm316, %v313, -inf
      %318 = vmax.xlane.f32.xlu0 %v317
      %v319 = vpop.xlane.xlu0 %318
      %v320 = vsub.f32 %v313, %v319
      %v321 = vmul.f32 %v320, 1.442695
      %v322 = vpow.pop %v321
      %v323 = vsel %vm316, %v322, 0.0
      %324 = vadd.xlane.f32.xlu0 %v323
      %v325 = vpop.xlane.xlu0 %324
      %v326 = vrcp.pop %v325
      %v327 = vmul.f32 %v322, %v326
      %v328 = vld [vmem:[%s2] sm:$0xff]
      %v329 = vld [vmem:[%s2 + $0x8] sm:$0xff]
      %330 = vmatprep.subr.mxu0 0.0
      %331 = vmatpush1.msra.mxu0 %v328
      %332 = vmatprep.subr.mxu0 0.0
      %333 = vmatpush1.msra.mxu0 %v329
      %334 = vmatprep.subr.mxu0 0.0
      %335 = vmatpush1.msra.mxu0 0.0
      %336 = vmatprep.subr.mxu0 0.0
      %337 = vmatpush1.msra.mxu0 0.0
      %338 = vmatprep.subr.mxu0 0.0
      %339 = vmatpush1.msra.mxu0 0.0
      %340 = vmatprep.subr.mxu0 0.0
      %341 = vmatpush1.msra.mxu0 0.0
      %342 = vmatprep.subr.mxu0 0.0
      %343 = vmatpush1.msra.mxu0 0.0
      %344 = vmatprep.subr.mxu0 0.0
      %345 = vmatpush1.msra.mxu0 0.0
      %346 = vmatprep.subr.mxu0 0.0
      %347 = vmatpush1.msra.mxu0 0.0
      %348 = vmatprep.subr.mxu0 0.0
      %349 = vmatpush1.msra.mxu0 0.0
      %350 = vmatprep.subr.mxu0 0.0
      %351 = vmatpush1.msra.mxu0 0.0
      %352 = vmatprep.subr.mxu0 0.0
      %353 = vmatpush1.msra.mxu0 0.0
      %354 = vmatprep.subr.mxu0 0.0
      %355 = vmatpush1.msra.mxu0 0.0
      %356 = vmatprep.subr.mxu0 0.0
      %357 = vmatpush1.msra.mxu0 0.0
      %358 = vmatprep.subr.mxu0 0.0
      %359 = vmatpush1.msra.mxu0 0.0
      %360 = vmatprep.subr.mxu0 0.0
      %361 = vmatpush1.msra.mxu0 0.0
      %362 = vmatprep.subr.mxu0 0.0
      %363 = vmatpush1.msra.mxu0 0.0
      %364 = vmatprep.subr.mxu0 0.0
      %365 = vmatpush1.msra.mxu0 0.0
      %366 = vmatprep.subr.mxu0 0.0
      %367 = vmatpush1.msra.mxu0 0.0
      %368 = vmatprep.subr.mxu0 0.0
      %369 = vmatpush1.msra.mxu0 0.0
      %370 = vmatprep.subr.mxu0 0.0
      %371 = vmatpush1.msra.mxu0 0.0
      %372 = vmatprep.subr.mxu0 0.0
      %373 = vmatpush1.msra.mxu0 0.0
      %374 = vmatprep.subr.mxu0 0.0
      %375 = vmatpush1.msra.mxu0 0.0
      %376 = vmatprep.subr.mxu0 0.0
      %377 = vmatpush1.msra.mxu0 0.0
      %378 = vmatprep.subr.mxu0 0.0
      %379 = vmatpush1.msra.mxu0 0.0
      %380 = vmatprep.subr.mxu0 0.0
      %381 = vmatpush1.msra.mxu0 0.0
      %382 = vmatprep.subr.mxu0 0.0
      %383 = vmatpush1.msra.mxu0 0.0
      %384 = vmatprep.subr.mxu0 0.0
      %385 = vmatpush1.msra.mxu0 0.0
      %386 = vmatprep.subr.mxu0 0.0
      %387 = vmatpush1.msra.mxu0 0.0
      %388 = vmatprep.subr.mxu0 0.0
      %389 = vmatpush1.msra.mxu0 0.0
      %390 = vmatprep.subr.mxu0 0.0
      %391 = vmatpush1.msra.mxu0 0.0
      %392 = vmatprep.subr.mxu0 0.0
      %393 = vmatpush1.msra.mxu0 0.0
      %394 = vmatprep.mubr.f32.mxu0 0.0
      %395 = vmatmul.mubr.f32.gmra.mrb[0].mxu0 %v171
      %v396 = vpop.f32.mrb[0].mxu0
      %v397 = vadd.f32 0.0, %v396
      %v398 = vpop.f32.mrb[0].mxu0
      %399 = vdwg.mxu0
      %v401 = vsel %vm316, %v327, 0
      %403 = vmatprep.subr.mxu0 0.0
      %404 = vmatpush1.msra.mxu0 %v397
      %405 = vmatprep.subr.mxu0 0.0
      %406 = vmatpush1.msra.mxu0 0.0
      %407 = vmatprep.subr.mxu0 0.0
      %408 = vmatpush1.msra.mxu0 0.0
      %409 = vmatprep.subr.mxu0 0.0
      %410 = vmatpush1.msra.mxu0 0.0
      %411 = vmatprep.subr.mxu0 0.0
      %412 = vmatpush1.msra.mxu0 0.0
      %413 = vmatprep.subr.mxu0 0.0
      %414 = vmatpush1.msra.mxu0 0.0
      %415 = vmatprep.subr.mxu0 0.0
      %416 = vmatpush1.msra.mxu0 0.0
      %417 = vmatprep.subr.mxu0 0.0
      %418 = vmatpush1.msra.mxu0 0.0
      %419 = vmatprep.subr.mxu0 0.0
      %420 = vmatpush1.msra.mxu0 0.0
      %421 = vmatprep.subr.mxu0 0.0
      %422 = vmatpush1.msra.mxu0 0.0
      %423 = vmatprep.subr.mxu0 0.0
      %424 = vmatpush1.msra.mxu0 0.0
      %425 = vmatprep.subr.mxu0 0.0
      %426 = vmatpush1.msra.mxu0 0.0
      %427 = vmatprep.subr.mxu0 0.0
      %428 = vmatpush1.msra.mxu0 0.0
      %429 = vmatprep.subr.mxu0 0.0
      %430 = vmatpush1.msra.mxu0 0.0
      %431 = vmatprep.subr.mxu0 0.0
      %432 = vmatpush1.msra.mxu0 0.0
      %433 = vmatprep.subr.mxu0 0.0
      %434 = vmatpush1.msra.mxu0 0.0
      %435 = vmatprep.subr.mxu0 0.0
      %436 = vmatpush1.msra.mxu0 0.0
      %437 = vmatprep.subr.mxu0 0.0
      %438 = vmatpush1.msra.mxu0 0.0
      %439 = vmatprep.subr.mxu0 0.0
      %440 = vmatpush1.msra.mxu0 0.0
      %441 = vmatprep.subr.mxu0 0.0
      %442 = vmatpush1.msra.mxu0 0.0
      %443 = vmatprep.subr.mxu0 0.0
      %444 = vmatpush1.msra.mxu0 0.0
      %445 = vmatprep.subr.mxu0 0.0
      %446 = vmatpush1.msra.mxu0 0.0
      %447 = vmatprep.subr.mxu0 0.0
      %448 = vmatpush1.msra.mxu0 0.0
      %449 = vmatprep.subr.mxu0 0.0
      %450 = vmatpush1.msra.mxu0 0.0
      %451 = vmatprep.subr.mxu0 0.0
      %452 = vmatpush1.msra.mxu0 0.0
      %453 = vmatprep.subr.mxu0 0.0
      %454 = vmatpush1.msra.mxu0 0.0
      %455 = vmatprep.subr.mxu0 0.0
      %456 = vmatpush1.msra.mxu0 0.0
      %457 = vmatprep.subr.mxu0 0.0
      %458 = vmatpush1.msra.mxu0 0.0
      %459 = vmatprep.subr.mxu0 0.0
      %460 = vmatpush1.msra.mxu0 0.0
      %461 = vmatprep.subr.mxu0 0.0
      %462 = vmatpush1.msra.mxu0 0.0
      %463 = vmatprep.subr.mxu0 0.0
      %464 = vmatpush1.msra.mxu0 0.0
      %465 = vmatprep.subr.mxu0 0.0
      %466 = vmatpush1.msra.mxu0 0.0
      %467 = vmatprep.mubr.f32.mxu0 0.0
      %468 = vmatmul.mubr.f32.gmra.mrb[0].mxu0 %v401
      %v469 = vpop.f32.mrb[0].mxu0
      %v470 = vadd.f32 0.0, %v469
      %v471 = vpop.f32.mrb[0].mxu0
      %472 = vdwg.mxu0
      %473 = vst [vmem:[%s165] sm:$0xff] %v470
      %p474 = scmp.lt.s32.totalorder %s14, 1
      %s475 = scalar_select %p474, %s14, 1
      %s476 = smul.addr %s475, 8
      %s477 = scalar_lea.vmem %s3, %s476
      // Predicated region
      $region33: #{attention_head.1} parent=31 // pred_check
        %p478 = pneg %p100
      $region34: #{attention_head.1} parent=31 // pred_check_branch
        %480 = sbr.rel (%p478) target = $region36
      $region35: #{attention_head.1} parent=31 // pred_region
        _
      $region36: #{attention_head.1} parent=31 // pred_fallthru
        _
    $region32: #{attention_head.1} parent=5 // pred_fallthru
      _
    %p481 = scmp.le.s32.totalorder 2, %s9
    // Predicated region
    $region37: #{attention_head.1} parent=5 // pred_check
      %p482 = pneg %p481
    $region38: #{attention_head.1} parent=5 // pred_check_branch
      %484 = sbr.rel (%p482) target = $region40
    $region39: #{attention_head.1} parent=5 // pred_region
      %s485 = ssub.s32 %s9, 2
      // Predicated region
      $region41: #{attention_head.1} parent=39 // pred_check
        %p486 = pneg %p106
      $region42: #{attention_head.1} parent=39 // pred_check_branch
        %488 = sbr.rel (%p486) target = $region44
      $region43: #{attention_head.1} parent=39 // pred_region
        %p489 = scmp.lt.s32.totalorder %s15, 1
        %s490 = scalar_select %p489, %s15, 1
        %s491 = smul.addr %s490, 8
        %s492 = scalar_lea.vmem %s3, %s491
      $region44: #{attention_head.1} parent=39 // pred_fallthru
        _
    $region40: #{attention_head.1} parent=5 // pred_fallthru
      _
  $region6: #{attention_head.1} parent=0 // loop_footer
    %s13 = sadd.s32 1, %s9
  $region7: #{attention_head.1} parent=0 // loop_footer_branch
    %8 = sbr.rel target = $region3
  $region8: #{attention_head.1} parent=0 // loop_exit
    _

</llo_original>
